<compile_context>
chip_gen: v7x
topology: tpu7x:2x2x1
jax: 0.10.0
libtpu: 0.0.40
codegen_flags: <defaults>
</compile_context>

<pallas_src>
import jax
import jax.numpy as jnp
from jax import lax
from jax.experimental import pallas as pl
from jax.experimental.pallas import tpu as pltpu


def _round_up(x, m):
    return ((x + m - 1) // m) * m


def _tpu_defaults():
    """(per-tile byte target, physical VMEM bytes), tuned per TPU generation."""
    vmem_cap = 128 * 1024 * 1024
    try:
        vmem_cap = int(pltpu.get_tpu_info().vmem_capacity_bytes)
    except Exception:
        pass
    kind = ""
    try:
        kind = jax.devices()[0].device_kind.lower()
    except Exception:
        pass
    if "v7" in kind or vmem_cap <= 64 * 1024 * 1024:
        target = 8 * 1024 * 1024    # v7x: 3.2 TB/s HBM -> bigger tiles hide step overhead
    elif "v6" in kind:
        target = 4 * 1024 * 1024    # v6e
    else:
        target = 3 * 1024 * 1024    # v5e / unknown: conservative
    return target, vmem_cap


def _pick_tile_s(S, row_bytes, target_bytes, min_steps=4):
    """Sequence rows per block.

    Guarantees the tile divides S exactly (no partial blocks -> every in-kernel
    slice statically in bounds), stays under the per-tile byte target, and
    prefers >= min_steps grid steps so input/output DMAs pipeline and the
    'parallel' axis can shard across v7x's two TensorCores.
    """
    if S <= 1:
        return 1
    max_rows = max(1, min(target_bytes // row_bytes,
                          (S + min_steps - 1) // min_steps))
    tS = 1
    for d in range(1, int(max_rows) + 1):
        if S % d == 0:
            tS = d
    # Degenerate divisor structure (e.g. prime S): one resident block beats a
    # flood of tiny steps, provided the whole tensor fits the byte target.
    if tS * 4 <= max_rows and S * row_bytes <= target_bytes:
        tS = S
    return tS


def _time_encoding_kernel(x_ref, mask_ref, len_ref, o_ref, ttab_ref):
    # x_ref:    [tS, B, D]  x.dtype   (streamed tile)
    # mask_ref: [B, S]      float32   (full block, resident across steps)
    # len_ref:  [1, B]      float32   (full block, resident across steps)
    # o_ref:    [tS, B, D]  x.dtype
    # ttab_ref: [S, B]      float32   VMEM scratch: full time table
    tS = x_ref.shape[0]
    S, B = ttab_ref.shape

    # Tiny [S, B] time table: mask[b, s] / (lengths[b] - 1) * s.
    # Recomputed every step (a few vregs of XLU/VPU work, both idle here) so
    # correctness does not depend on which core executes grid index 0.
    inv = pl.reciprocal(len_ref[...] - 1.0, approx=False)                   # [1, B]
    pos = lax.broadcasted_iota(jnp.int32, (S, B), 0).astype(jnp.float32)    # [S, B]
    ttab_ref[...] = mask_ref[...].T * inv * pos                             # [S, B]

    # In-bounds window of the table for this tile (tS always divides S).
    start = pl.program_id(0) * tS
    if tS % 8 == 0:
        start = pl.multiple_of(start, 8)
    time_sb = ttab_ref[pl.ds(start, tS), :]                                 # [tS, B]

    x = x_ref[...]
    if x.dtype == jnp.float32:
        o_ref[...] = x + time_sb[:, :, None]
    else:
        # Native-dtype add (bf16 VPU on v6e/v7x; Mosaic widens on v5e) avoids
        # upcasting the whole streamed tile to f32.
        o_ref[...] = x + time_sb.astype(x.dtype)[:, :, None]


def time_encoding(x, mask, lengths):
    """x: [S, B, D] (f32/bf16), mask: [B, S] (bool/float), lengths: [B]."""
    S, B, D = x.shape
    itemsize = jnp.dtype(x.dtype).itemsize

    # Small operands stay in their native [batch, seq] orientation: no
    # wrapper-side transpose/relayout launch.  The dtype converts below are
    # tiny elementwise ops that XLA can fuse into the mask/length producers.
    mask_f = mask.astype(jnp.float32).reshape(B, S)
    len_f = lengths.astype(jnp.float32).reshape(1, B)

    target_bytes, vmem_cap = _tpu_defaults()

    # Padded VMEM footprint of one sequence row of x: (B, D) maps to
    # (sublane, lane); B < 8 or D < 128 gets padded (demo shape only).
    sub = max(8, 32 // itemsize)
    row_bytes = _round_up(B, sub) * _round_up(D, 128) * itemsize
    tS = _pick_tile_s(S, row_bytes, target_bytes)
    assert S % tS == 0
    grid = (S // tS,)

    # VMEM budget: double-buffered in/out x tiles + resident small operands,
    # capped safely below the chip's physical VMEM (64 MiB on v7x).
    tile_vmem = tS * row_bytes
    mask_pad = _round_up(B, 8) * _round_up(S, 128) * 4
    ttab_pad = _round_up(S, 8) * _round_up(B, 128) * 4
    len_pad = 8 * 128 * 4
    vmem_needed = 4 * tile_vmem + 2 * mask_pad + ttab_pad + 2 * len_pad + (2 << 20)
    vmem_limit = int(min(vmem_cap - (16 << 20), max(vmem_needed, 16 << 20)))

    cost = pl.CostEstimate(
        flops=int(S * B * D + 4 * S * B * grid[0]),
        transcendentals=0,
        bytes_accessed=int(2 * S * B * D * itemsize + S * B * 4 + B * 4),
    )

    return pl.pallas_call(
        _time_encoding_kernel,
        out_shape=jax.ShapeDtypeStruct((S, B, D), x.dtype),
        grid=grid,
        in_specs=[
            pl.BlockSpec((tS, B, D), lambda i: (i, 0, 0)),   # x: streamed
            pl.BlockSpec((B, S), lambda i: (0, 0)),          # mask: resident
            pl.BlockSpec((1, B), lambda i: (0, 0)),          # lengths: resident
        ],
        out_specs=pl.BlockSpec((tS, B, D), lambda i: (i, 0, 0)),
        scratch_shapes=[pltpu.VMEM((S, B), jnp.float32)],
        compiler_params=pltpu.CompilerParams(
            dimension_semantics=("parallel",),
            vmem_limit_bytes=vmem_limit,
        ),
        cost_estimate=cost,
    )(x, mask_f, len_f)


def time_encoding_ref(x, mask, lengths):
    """Pure-JAX reference mirroring the PyTorch forward (eval mode)."""
    S, B, D = x.shape
    time = mask.astype(jnp.float32) / (lengths.astype(jnp.float32)[:, None] - 1.0)  # [B, S]
    time = time * jnp.arange(S, dtype=jnp.float32)[None, :]                         # [B, S]
    time = time.T                                                                   # [S, B]
    return (x.astype(jnp.float32) + time[..., None]).astype(x.dtype)


if __name__ == "__main__":
    key = jax.random.PRNGKey(0)
    S, B, D = 8, 2, 32  # seq, batch, d_model

    kx, _ = jax.random.split(key)
    x = jax.random.normal(kx, (S, B, D), dtype=jnp.float32)

    lengths = jnp.array([8, 6], dtype=jnp.int32)                 # [B]
    mask = (jnp.arange(S)[None, :] < lengths[:, None])           # [B, S] bool

    out = jax.block_until_ready(time_encoding(x, mask, lengths))
    ref = time_encoding_ref(x, mask, lengths)

    assert out.shape == (S, B, D)
    assert jnp.allclose(out, ref, atol=1e-5, rtol=1e-5)

    print("KERNEL_OK")
</pallas_src>

<mosaic_0001>
module attributes {stable_mosaic.version = 11 : i64} {
  func.func @_time_encoding_kernel(%arg0: i32, %arg1: memref<2x2x32xf32, #tpu.memory_space<vmem>>, %arg2: memref<2x8xf32, #tpu.memory_space<vmem>>, %arg3: memref<1x2xf32, #tpu.memory_space<vmem>>, %arg4: memref<2x2x32xf32, #tpu.memory_space<vmem>>, %arg5: memref<8x2xf32, #tpu.memory_space<vmem>>) attributes {dimension_semantics = [#tpu.dimension_semantics<parallel>], iteration_bounds = array<i64: 4>, scalar_prefetch = 0 : i64, scratch_operands = 1 : i64, tpu.core_type = #tpu.core_type<tc>, window_params = [{transform_indices = @transform_0, window_bounds = array<i64: 2, 2, 32>}, {pipeline_mode = #tpu.pipeline_mode<synchronous>, transform_indices = @transform_1, window_bounds = array<i64: 2, 8>}, {pipeline_mode = #tpu.pipeline_mode<synchronous>, transform_indices = @transform_2, window_bounds = array<i64: 1, 2>}, {transform_indices = @transform_3, window_bounds = array<i64: 2, 2, 32>}]} {
    %c0 = arith.constant 0 : index
    %c0_0 = arith.constant 0 : index
    %0 = vector.load %arg3[%c0, %c0_0] : memref<1x2xf32, #tpu.memory_space<vmem>>, vector<1x2xf32>
    %cst = arith.constant 1.000000e+00 : f32
    %1 = vector.broadcast %cst : f32 to vector<1x2xf32>
    %2 = arith.subf %0, %1 : vector<1x2xf32>
    %3 = tpu.reciprocal %2 : vector<1x2xf32> -> vector<1x2xf32>
    %4 = tpu.iota {dimensions = array<i32: 0>} : vector<8x2xi32>
    %5 = arith.sitofp %4 : vector<8x2xi32> to vector<8x2xf32>
    %c0_1 = arith.constant 0 : index
    %c0_2 = arith.constant 0 : index
    %6 = vector.load %arg2[%c0_1, %c0_2] : memref<2x8xf32, #tpu.memory_space<vmem>>, vector<2x8xf32>
    %7 = tpu.transpose %6, [1, 0] : vector<2x8xf32> -> vector<8x2xf32>
    %8 = vector.broadcast %3 : vector<1x2xf32> to vector<8x2xf32>
    %9 = arith.mulf %7, %8 : vector<8x2xf32>
    %10 = arith.mulf %9, %5 : vector<8x2xf32>
    %c0_3 = arith.constant 0 : index
    %c0_4 = arith.constant 0 : index
    %11 = vector.load %arg5[%c0_3, %c0_4] : memref<8x2xf32, #tpu.memory_space<vmem>>, vector<8x2xf32>
    tpu.vector_store %arg5[%c0_3, %c0_4], %10 {strides = array<i32>} : memref<8x2xf32, #tpu.memory_space<vmem>>, vector<8x2xf32>,
    %c2_i32 = arith.constant 2 : i32
    %12 = arith.muli %arg0, %c2_i32 : i32
    %13 = arith.index_cast %12 : i32 to index
    %c0_5 = arith.constant 0 : index
    %14 = vector.load %arg5[%13, %c0_5] : memref<8x2xf32, #tpu.memory_space<vmem>>, vector<2x2xf32>
    %c0_6 = arith.constant 0 : index
    %c0_7 = arith.constant 0 : index
    %c0_8 = arith.constant 0 : index
    %15 = vector.load %arg1[%c0_6, %c0_7, %c0_8] : memref<2x2x32xf32, #tpu.memory_space<vmem>>, vector<2x2x32xf32>
    %16 = vector.shape_cast %14 : vector<2x2xf32> to vector<2x2x1xf32>
    %17 = vector.broadcast %16 : vector<2x2x1xf32> to vector<2x2x32xf32>
    %18 = arith.addf %15, %17 : vector<2x2x32xf32>
    %c0_9 = arith.constant 0 : index
    %c0_10 = arith.constant 0 : index
    %c0_11 = arith.constant 0 : index
    %19 = vector.load %arg4[%c0_9, %c0_10, %c0_11] : memref<2x2x32xf32, #tpu.memory_space<vmem>>, vector<2x2x32xf32>
    tpu.vector_store %arg4[%c0_9, %c0_10, %c0_11], %18 {strides = array<i32>} : memref<2x2x32xf32, #tpu.memory_space<vmem>>, vector<2x2x32xf32>,
    return
  }
  func.func @transform_0(%arg0: i32) -> (i32, i32, i32) {
    %c0_i32 = arith.constant 0 : i32
    %c0_i32_0 = arith.constant 0 : i32
    %c0_i32_1 = arith.constant 0 : i32
    return %arg0, %c0_i32, %c0_i32_0 : i32, i32, i32
  }
  func.func @transform_1(%arg0: i32) -> (i32, i32) {
    %c0_i32 = arith.constant 0 : i32
    %c0_i32_0 = arith.constant 0 : i32
    %c0_i32_1 = arith.constant 0 : i32
    return %c0_i32, %c0_i32_0 : i32, i32
  }
  func.func @transform_2(%arg0: i32) -> (i32, i32) {
    %c0_i32 = arith.constant 0 : i32
    %c0_i32_0 = arith.constant 0 : i32
    %c0_i32_1 = arith.constant 0 : i32
    return %c0_i32, %c0_i32_0 : i32, i32
  }
  func.func @transform_3(%arg0: i32) -> (i32, i32, i32) {
    %c0_i32 = arith.constant 0 : i32
    %c0_i32_0 = arith.constant 0 : i32
    %c0_i32_1 = arith.constant 0 : i32
    return %arg0, %c0_i32, %c0_i32_0 : i32, i32, i32
  }
}

</mosaic_0001>

<llo_original>
// kernel: tpu_custom_call.1
$region0: #{tpu_custom_call.1}
  #allocation0 [shape = 'u32[]', space=smem, size = 0x4, offset = 0x4, fixed_abs, tag = 'smem constant byte address 0x4 - core index']
  #allocation1 [shape = 'u32[144,128]{1,0:T(1,128)}', space=vmem, size = 0x12000, scoped, tag = 'internal scratch']
  #allocation2 [shape = 'f32[8,2]{1,0:T(8,128)}', space=vmem, size = 0x1000, scoped, tag = 'scratch operand']
  %s0 = inlined_call_operand.hbm [shape: f32[8,2,32], index: 0, kind: input, shape index: {}]
  %s1 = inlined_call_operand.vmem [shape: f32[2,8], index: 1, kind: input, shape index: {}]
  %s2 = inlined_call_operand.vmem [shape: f32[1,2], index: 2, kind: input, shape index: {}]
  %s3 = inlined_call_operand.hbm [shape: f32[8,2,32], index: 3, kind: output, shape index: {}]
  %s4 = sld [smem:[#allocation0]]
  $region49: #{tpu_custom_call.1} parent=0
    _
  %s6 = ssub.s32 1, %s4
  %s7 = scalar_select 0, %s6, %s4
  $region1: #{tpu_custom_call.1} parent=0
    #allocation3 [shape = 'u8[4096]{0}', space=vmem, size = 0x1000, scoped, tag = 'input window, operand 0']
    #allocation4 [shape = 's32[2]{0}', space=sflag, size = 0x8, scoped, tag = 'scoped memory for tpu_custom_call.1']
    #allocation5 [shape = 's32[2]{0}', space=sflag, size = 0x8, scoped, tag = 'scoped memory for tpu_custom_call.1']
    #allocation6 [shape = 'u8[4096]{0}', space=vmem, size = 0x1000, scoped, tag = 'output window, operand 0']
    %8 = vsyncpa [#allocation4], 0
    %s9 = scalar_lea.sflag [#allocation4], 1
    %10 = vsyncpa %s9, 0
    %11 = vsyncpa [#allocation5], 0
    %s12 = scalar_lea.sflag [#allocation5], 1
    %13 = vsyncpa %s12, 0
    loop: start=0, step=1, limit=6
    $region2: #{tpu_custom_call.1} parent=1 // loop_pre_header
      _
    $region3: #{tpu_custom_call.1} parent=1 // loop_header
      %s15 = sphi 0, %s19
      %p16 = scmp.ge.s32.totalorder %s15, 6
      %s25 = sphi 0, %s27
      %s28 = sphi 0, %s25
      %s29 = sphi 0, %s28
      %s45 = sphi 0, %s29
      %s49 = sphi 0, %s49
      %s51 = sphi 0, %s49
      %s52 = sphi 0, %s51
      %s66 = sphi 0, %s52
      %s70 = sphi 0, %s70
      %s72 = sphi 0, %s70
      %s73 = sphi 0, %s72
      %s87 = sphi 0, %s73
      %s93 = sphi 0, %s95
      %s96 = sphi 0, %s93
      %s97 = sphi 0, %s96
      %s113 = sphi 0, %s97
    $region4: #{tpu_custom_call.1} parent=1 // loop_header_branch
      %18 = sbr.rel (%p16) target = $region8
    $region5: #{tpu_custom_call.1} parent=1 // loop_body
      %s20 = ssub.s32 %s15, 1
      %s21 = ssub.s32 %s15, 2
      %s22 = sadd.s32 %s15, 1
      %s23 = ssub.s32 %s15, %s22
      %p24 = scmp.eq.s32.totalorder %s23, 0
      %s26 = sadd.s32 %s25, 1
      %s27 = scalar_select %p24, %s25, %s26
      %p30 = pneg %p24
      %p31 = scmp.eq.s32.totalorder %s15, 3
      %p32 = por %p30, %p31
      %p33 = scmp.ne.s32.totalorder %s25, %s28
      %p34 = scmp.eq.s32.totalorder %s15, 0
      %p35 = por %p33, %p34
      %p36 = scmp.ne.s32.totalorder %s25, %s28
      %p37 = scmp.eq.s32.totalorder %s20, 3
      %p38 = por %p36, %p37
      %p39 = scmp.ne.s32.totalorder %s28, %s29
      %p40 = scmp.eq.s32.totalorder %s20, 0
      %p41 = por %p39, %p40
      %p42 = scmp.ne.s32.totalorder %s28, %s29
      %p43 = scmp.eq.s32.totalorder %s21, 3
      %p44 = por %p42, %p43
      %p46 = scmp.ne.s32.totalorder %s29, %s45
      %p47 = scmp.eq.s32.totalorder %s21, 0
      %p48 = por %p46, %p47
      %s50 = sadd.s32 %s49, 1
      %p53 = scmp.eq.s32.totalorder %s15, 3
      %p54 = scmp.ne.s32.totalorder %s49, %s51
      %p55 = scmp.eq.s32.totalorder %s15, 0
      %p56 = por %p54, %p55
      %p57 = scmp.ne.s32.totalorder %s49, %s51
      %p58 = scmp.eq.s32.totalorder %s20, 3
      %p59 = por %p57, %p58
      %p60 = scmp.ne.s32.totalorder %s51, %s52
      %p61 = scmp.eq.s32.totalorder %s20, 0
      %p62 = por %p60, %p61
      %p63 = scmp.ne.s32.totalorder %s51, %s52
      %p64 = scmp.eq.s32.totalorder %s21, 3
      %p65 = por %p63, %p64
      %p67 = scmp.ne.s32.totalorder %s52, %s66
      %p68 = scmp.eq.s32.totalorder %s21, 0
      %p69 = por %p67, %p68
      %s71 = sadd.s32 %s70, 1
      %p74 = scmp.eq.s32.totalorder %s15, 3
      %p75 = scmp.ne.s32.totalorder %s70, %s72
      %p76 = scmp.eq.s32.totalorder %s15, 0
      %p77 = por %p75, %p76
      %p78 = scmp.ne.s32.totalorder %s70, %s72
      %p79 = scmp.eq.s32.totalorder %s20, 3
      %p80 = por %p78, %p79
      %p81 = scmp.ne.s32.totalorder %s72, %s73
      %p82 = scmp.eq.s32.totalorder %s20, 0
      %p83 = por %p81, %p82
      %p84 = scmp.ne.s32.totalorder %s72, %s73
      %p85 = scmp.eq.s32.totalorder %s21, 3
      %p86 = por %p84, %p85
      %p88 = scmp.ne.s32.totalorder %s73, %s87
      %p89 = scmp.eq.s32.totalorder %s21, 0
      %p90 = por %p88, %p89
      %s91 = ssub.s32 %s15, %s22
      %p92 = scmp.eq.s32.totalorder %s91, 0
      %s94 = sadd.s32 %s93, 1
      %s95 = scalar_select %p92, %s93, %s94
      %p98 = pneg %p92
      %p99 = scmp.eq.s32.totalorder %s15, 3
      %p100 = por %p98, %p99
      %p101 = scmp.ne.s32.totalorder %s93, %s96
      %p102 = scmp.eq.s32.totalorder %s15, 0
      %p103 = por %p101, %p102
      %p104 = scmp.ne.s32.totalorder %s93, %s96
      %p105 = scmp.eq.s32.totalorder %s20, 3
      %p106 = por %p104, %p105
      %p107 = scmp.ne.s32.totalorder %s96, %s97
      %p108 = scmp.eq.s32.totalorder %s20, 0
      %p109 = por %p107, %p108
      %p110 = scmp.ne.s32.totalorder %s96, %s97
      %p111 = scmp.eq.s32.totalorder %s21, 3
      %p112 = por %p110, %p111
      %p114 = scmp.ne.s32.totalorder %s97, %s113
      %p115 = scmp.eq.s32.totalorder %s21, 0
      %p116 = por %p114, %p115
      %p117 = scmp.le.s32.totalorder 1, %s15
      %p118 = scmp.lt.s32.totalorder %s15, 5
      %p119 = pnand %p117, %p118
      %p120 = pneg %p119
      // Predicated region
      $region9: #{tpu_custom_call.1} parent=5 // pred_check
        _
      $region10: #{tpu_custom_call.1} parent=5 // pred_check_branch
        %122 = sbr.rel (%p119) target = $region12
      $region11: #{tpu_custom_call.1} parent=5 // pred_region
        %s123 = ssub.s32 %s15, 1
        // Predicated region
        $region13: #{tpu_custom_call.1} parent=11 // pred_check
          %p124 = pneg %p62
        $region14: #{tpu_custom_call.1} parent=11 // pred_check_branch
          %126 = sbr.rel (%p124) target = $region16
        $region15: #{tpu_custom_call.1} parent=11 // pred_region
          _
        $region16: #{tpu_custom_call.1} parent=11 // pred_fallthru
          _
        // Predicated region
        $region17: #{tpu_custom_call.1} parent=11 // pred_check
          %p127 = pneg %p83
        $region18: #{tpu_custom_call.1} parent=11 // pred_check_branch
          %129 = sbr.rel (%p127) target = $region20
        $region19: #{tpu_custom_call.1} parent=11 // pred_region
          _
        $region20: #{tpu_custom_call.1} parent=11 // pred_fallthru
          _
      $region12: #{tpu_custom_call.1} parent=5 // pred_fallthru
        _
      %p130 = scmp.lt.s32.totalorder %s15, 4
      // Predicated region
      $region21: #{tpu_custom_call.1} parent=5 // pred_check
        %p131 = pneg %p130
      $region22: #{tpu_custom_call.1} parent=5 // pred_check_branch
        %133 = sbr.rel (%p131) target = $region24
      $region23: #{tpu_custom_call.1} parent=5 // pred_region
        // Predicated region
        $region25: #{tpu_custom_call.1} parent=23 // pred_check
          %p134 = pneg %p35
        $region26: #{tpu_custom_call.1} parent=23 // pred_check_branch
          %136 = sbr.rel (%p134) target = $region28
        $region27: #{tpu_custom_call.1} parent=23 // pred_region
          %s137 = sand.u32 %s25, 1
          %s138 = scalar_lea.sflag [#allocation4], %s137
          %s139 = sand.u32 %s25, 1
          %s140 = smul.addr %s139, 4
          %s141 = scalar_lea.vmem [#allocation3], %s140
          %s142 = smul.u32 2, %s15
          %s144 = ssub.s32 64, 64
          %145 = vsyncadd %s138, %s144
          %s146 = smul.addr %s142, 32
          %s147 = scalar_lea.hbm %s0, %s146
          %s148 = sshll.u32 %s141, 4
          %s149 = int_to_ptr.vmem [resolvable:$true] %s148
          %154 = dma.hbm_to_vmem [thread:$0]  %s147, 64, %s149, %s138, 32, 32, 2
        $region28: #{tpu_custom_call.1} parent=23 // pred_fallthru
          _
      $region24: #{tpu_custom_call.1} parent=5 // pred_fallthru
        _
      %p155 = scmp.le.s32.totalorder 1, %s15
      %p156 = scmp.lt.s32.totalorder %s15, 5
      %p157 = pnand %p155, %p156
      %p158 = pneg %p157
      // Predicated region
      $region29: #{tpu_custom_call.1} parent=5 // pred_check
        _
      $region30: #{tpu_custom_call.1} parent=5 // pred_check_branch
        %160 = sbr.rel (%p157) target = $region32
      $region31: #{tpu_custom_call.1} parent=5 // pred_region
        %s161 = ssub.s32 %s15, 1
        %s162 = sand.u32 %s28, 1
        %s163 = scalar_lea.sflag [#allocation4], %s162
        %s164 = sand.u32 %s28, 1
        %s165 = smul.addr %s164, 4
        %s166 = scalar_lea.vmem [#allocation3], %s165
        // Predicated region
        $region33: #{tpu_custom_call.1} parent=31 // pred_check
          %p167 = pneg %p41
        $region34: #{tpu_custom_call.1} parent=31 // pred_check_branch
          %169 = sbr.rel (%p167) target = $region36
        $region35: #{tpu_custom_call.1} parent=31 // pred_region
          %170 = dma.done %s163, 64
        $region36: #{tpu_custom_call.1} parent=31 // pred_fallthru
          _
        %s171 = sand.u32 %s28, 1
        %s172 = scalar_lea.sflag [#allocation4], %s171
        %s173 = sand.u32 %s28, 1
        %s174 = smul.addr %s173, 4
        %s175 = scalar_lea.vmem [#allocation3], %s174
        %p176 = pneg %p41
        %p177 = pneg %p38
        %p178 = pneg %p62
        %p179 = pneg %p59
        %p180 = pneg %p83
        %p181 = pneg %p80
        %p182 = pneg %p109
        %p183 = pneg %p106
        %s184 = sand.u32 %s96, 1
        %s185 = scalar_lea.sflag [#allocation5], %s184
        %s186 = sand.u32 %s96, 1
        %s187 = smul.addr %s186, 4
        %s188 = scalar_lea.vmem [#allocation6], %s187
        %s189 = smul.u32 2, %s20
        %s190 = smul.u32 2, %s20
        %v191 = vld [vmem:[%s2] sm:$0x1]
        %v192 = vsub.f32 %v191, 1.0
        %v193 = vrcp.pop %v192
        %v194 = vlaneseq
        %v195 = vshrl.u32 %v194, 7
        %v196 = vcvt.s32.f32 %v195
        %v197 = vld [vmem:[%s1] sm:$0x3]
        %198 = vxpose.xlu0.b32.start [1/16] %v197, 128
        %199 = vxpose.xlu0.b32.cont [2/16] 0.0, 128
        %200 = vxpose.xlu0.b32.cont [3/16] 0.0, 128
        %201 = vxpose.xlu0.b32.cont [4/16] 0.0, 128
        %202 = vxpose.xlu0.b32.cont [5/16] 0.0, 128
        %203 = vxpose.xlu0.b32.cont [6/16] 0.0, 128
        %204 = vxpose.xlu0.b32.cont [7/16] 0.0, 128
        %205 = vxpose.xlu0.b32.cont [8/16] 0.0, 128
        %206 = vxpose.xlu0.b32.cont [9/16] 0.0, 128
        %207 = vxpose.xlu0.b32.cont [10/16] 0.0, 128
        %208 = vxpose.xlu0.b32.cont [11/16] 0.0, 128
        %209 = vxpose.xlu0.b32.cont [12/16] 0.0, 128
        %210 = vxpose.xlu0.b32.cont [13/16] 0.0, 128
        %211 = vxpose.xlu0.b32.cont [14/16] 0.0, 128
        %212 = vxpose.xlu0.b32.cont [15/16] 0.0, 128
        %213 = vxpose.xlu0.b32.end [16/16] 0.0, 128
        %v214 = vpop.trf.xlu0
        %v215 = vpop.trf.xlu0
        %v216 = vpop.trf.xlu0
        %v217 = vpop.trf.xlu0
        %v218 = vpop.trf.xlu0
        %v219 = vpop.trf.xlu0
        %v220 = vpop.trf.xlu0
        %v221 = vpop.trf.xlu0
        %v222 = vpop.trf.xlu0
        %v223 = vpop.trf.xlu0
        %v224 = vpop.trf.xlu0
        %v225 = vpop.trf.xlu0
        %v226 = vpop.trf.xlu0
        %v227 = vpop.trf.xlu0
        %v228 = vpop.trf.xlu0
        %v229 = vpop.trf.xlu0
        %v231 = vlaneseq
        %v232 = vshrl.u32 %v231, 7
        %v233 = vsub.s32 0, %v232
        %v234 = vrot.slane %v193, %v233
        %v236 = vmul.f32 %v214, %v234
        %v237 = vmul.f32 %v236, %v196
        %vm238 = vcmask 15360
        %239 = vst.msk [vmem:[#allocation2] sm:$0xff] %vm238, %v237
        %s240 = smul.u32 %s20, 2
        %s241 = scalar_lea.vmem [#allocation2], %s240
        %v242 = vld [vmem:[%s241] sm:$0x3]
        %v243 = vld [vmem:[%s166] sm:$0x3]
        %v244 = vld [vmem:[%s166 + $0x2] sm:$0x3]
        %v245 = vlaneseq
        %v246 = vshrl.u32 %v245, 7
        %v247 = vsub.s32 0, %v246
        %v248 = vrot.slane %v242, %v247
        %250 = vbcast.lane.b32.xlu0 %v248, 256
        %v251 = vpop.permute.xlu0 %250
        %v252 = vlaneseq
        %v253 = vshrl.u32 %v252, 7
        %v254 = vsub.s32 1, %v253
        %v255 = vrot.slane %v242, %v254
        %257 = vbcast.lane.b32.xlu0 %v255, 256
        %v258 = vpop.permute.xlu0 %257
        %v259 = vadd.f32 %v243, %v251
        %v260 = vadd.f32 %v244, %v258
        %vm261 = vcmask 254976
        %262 = vst.msk [vmem:[%s188] sm:$0x3] %vm261, %v259
        %263 = vst.msk [vmem:[%s188 + $0x2] sm:$0x3] %vm261, %v260
        %s264 = sand.u32 %s96, 1
        %s265 = scalar_lea.sflag [#allocation5], %s264
        %s266 = sand.u32 %s96, 1
        %s267 = smul.addr %s266, 4
        %s268 = scalar_lea.vmem [#allocation6], %s267
        // Predicated region
        $region37: #{tpu_custom_call.1} parent=31 // pred_check
          %p269 = pneg %p106
        $region38: #{tpu_custom_call.1} parent=31 // pred_check_branch
          %271 = sbr.rel (%p269) target = $region40
        $region39: #{tpu_custom_call.1} parent=31 // pred_region
          %s272 = smul.u32 2, %s20
          %s274 = ssub.s32 64, 64
          %275 = vsyncadd %s265, %s274
          %s276 = smul.addr %s272, 32
          %s277 = scalar_lea.hbm %s3, %s276
          %s278 = sshll.u32 %s268, 4
          %s279 = int_to_ptr.vmem [resolvable:$true] %s278
          %284 = dma.vmem_to_hbm [thread:$0]  %s279, 64, %s277, %s265, 32, 32, 2
        $region40: #{tpu_custom_call.1} parent=31 // pred_fallthru
          _
      $region32: #{tpu_custom_call.1} parent=5 // pred_fallthru
        _
      %p285 = scmp.le.s32.totalorder 2, %s15
      // Predicated region
      $region41: #{tpu_custom_call.1} parent=5 // pred_check
        %p286 = pneg %p285
      $region42: #{tpu_custom_call.1} parent=5 // pred_check_branch
        %288 = sbr.rel (%p286) target = $region44
      $region43: #{tpu_custom_call.1} parent=5 // pred_region
        %s289 = ssub.s32 %s15, 2
        // Predicated region
        $region45: #{tpu_custom_call.1} parent=43 // pred_check
          %p290 = pneg %p112
        $region46: #{tpu_custom_call.1} parent=43 // pred_check_branch
          %292 = sbr.rel (%p290) target = $region48
        $region47: #{tpu_custom_call.1} parent=43 // pred_region
          %s293 = sand.u32 %s97, 1
          %s294 = scalar_lea.sflag [#allocation5], %s293
          %s295 = sand.u32 %s97, 1
          %s296 = smul.addr %s295, 4
          %s297 = scalar_lea.vmem [#allocation6], %s296
          %298 = dma.done %s294, 64
        $region48: #{tpu_custom_call.1} parent=43 // pred_fallthru
          _
      $region44: #{tpu_custom_call.1} parent=5 // pred_fallthru
        _
    $region6: #{tpu_custom_call.1} parent=1 // loop_footer
      %s19 = sadd.s32 1, %s15
    $region7: #{tpu_custom_call.1} parent=1 // loop_footer_branch
      %14 = sbr.rel target = $region3
    $region8: #{tpu_custom_call.1} parent=1 // loop_exit
      _
    %299 = vsyncpa [#allocation4], 1
    %s300 = scalar_lea.sflag [#allocation4], 1
    %301 = vsyncpa %s300, 1
    %302 = vsyncpa [#allocation5], 1
    %s303 = scalar_lea.sflag [#allocation5], 1
    %304 = vsyncpa %s303, 1

</llo_original>
